<compile_context>
chip_gen: v5e
topology: v5e:2x2
jax: 0.10.0
libtpu: 0.0.40
codegen_flags: <defaults>
</compile_context>

<pallas_src>
import math

import jax
import jax.numpy as jnp
from jax.experimental import pallas as pl
from jax.experimental.pallas import tpu as pltpu


_VMEM_PLAN_BUDGET = 28 * 1024 * 1024      # planned tile bytes must stay under this
_VMEM_LIMIT_BYTES = 48 * 1024 * 1024      # scoped limit handed to Mosaic (< v7x 64 MiB phys)
_RESIDENT_B_BUDGET = 12 * 1024 * 1024     # max bytes (double-buffered) for a resident B operand
_FUSED_VMEM_BUDGET = 4 * 1024 * 1024      # threshold for the fused single-launch path


def _round_up(x, m):
    return ((x + m - 1) // m) * m


def _pick_tile(dim_p, preferred):
    """Largest multiple of 128 <= preferred that divides dim_p (dim_p % 128 == 0)."""
    best = 128
    t = 128
    cap = min(preferred, dim_p)
    while t <= cap:
        if dim_p % t == 0:
            best = t
        t += 128
    return best


def _pad2d(x, rp, cp):
    r, c = x.shape
    if r == rp and c == cp:
        return x
    return jnp.pad(x, ((0, rp - r), (0, cp - c)))


# ---------------------------------------------------------------------------
# Fused small-problem kernel: output = adj @ (x @ w) + bias, single grid point.
# ---------------------------------------------------------------------------
def _fused_gcn_kernel(x_ref, w_ref, adj_ref, bias_ref, o_ref):
    support = jnp.dot(x_ref[...], w_ref[...], preferred_element_type=jnp.float32)
    out = jnp.dot(adj_ref[...], support, preferred_element_type=jnp.float32)
    o_ref[...] = (out + bias_ref[...]).astype(o_ref.dtype)


def _fused_fits(n_p, in_p, out_p, itemsize=4):
    total = (n_p * in_p + in_p * out_p + n_p * n_p + out_p + n_p * out_p) * itemsize
    return 2 * total <= _FUSED_VMEM_BUDGET


# ---------------------------------------------------------------------------
# Tiled matmul (+ optional bias) with f32 accumulator, bf16 MXU compute.
# ---------------------------------------------------------------------------
def _make_matmul_kernel(*, num_k, tk, b_resident, has_bias, single_k, compute_dtype):
    def kernel(*refs):
        idx = 0
        a_ref = refs[idx]; idx += 1
        b_ref = refs[idx]; idx += 1
        bias_ref = None
        if has_bias:
            bias_ref = refs[idx]; idx += 1
        o_ref = refs[idx]; idx += 1
        acc_ref = None if single_k else refs[idx]

        k = pl.program_id(2)

        if b_resident and num_k > 1:
            off = pl.multiple_of(k * tk, tk)
            b_tile = b_ref[pl.ds(off, tk), :]
        else:
            b_tile = b_ref[...]

        partial = jnp.dot(
            a_ref[...].astype(compute_dtype),
            b_tile.astype(compute_dtype),
            preferred_element_type=jnp.float32,
        )

        if single_k:
            out = partial
            if has_bias:
                out = out + bias_ref[...].astype(jnp.float32)
            o_ref[...] = out.astype(o_ref.dtype)
        else:
            @pl.when(k == 0)
            def _zero():
                acc_ref[...] = jnp.zeros_like(acc_ref)

            acc_ref[...] += partial

            @pl.when(k == num_k - 1)
            def _finish():
                out = acc_ref[...]
                if has_bias:
                    out = out + bias_ref[...].astype(jnp.float32)
                o_ref[...] = out.astype(o_ref.dtype)

    return kernel


def tiled_matmul(a, b, bias=None, *, out_dtype=None, compute_dtype=jnp.bfloat16,
                 preferred_tm=512, preferred_tn=512, preferred_tk=512):
    """a @ b (+ bias[None, :]) with a tiled Pallas accumulator kernel."""
    m, k = a.shape
    k2, n = b.shape
    assert k == k2, (a.shape, b.shape)
    if bias is not None:
        assert bias.shape == (n,), bias.shape
    out_dtype = out_dtype if out_dtype is not None else a.dtype
    out_bytes = jnp.dtype(out_dtype).itemsize

    # Pad only to 128 multiples (no-op for 128-aligned dims).
    m_p, k_p, n_p = _round_up(m, 128), _round_up(k, 128), _round_up(n, 128)
    a_p = _pad2d(a, m_p, k_p)
    b_p = _pad2d(b, k_p, n_p)
    bytes_a = a_p.dtype.itemsize
    bytes_b = b_p.dtype.itemsize

    # Tile edges: divisors of the padded dims (lane/MXU aligned).
    tn = _pick_tile(n_p, preferred_tn)
    tk = _pick_tile(k_p, preferred_tk)
    eff_tm_pref = max(preferred_tm, 1024) if tn <= 256 else preferred_tm
    tm = _pick_tile(m_p, eff_tm_pref)
    # Keep >= 2 blocks on the leading parallel (row) axis for v7x megacore.
    if m_p // tm < 2 and m_p >= 256:
        tm = _pick_tile(m_p, m_p // 2)

    # Keep B fully VMEM-resident when it is read once (single column block).
    b_resident = (n_p == tn) and (2 * k_p * tn * bytes_b <= _RESIDENT_B_BUDGET)

    def plan_bytes(tm_, tk_, b_res):
        total = 2 * tm_ * tk_ * bytes_a
        total += 2 * (k_p if b_res else tk_) * tn * bytes_b
        total += 2 * tm_ * tn * out_bytes
        total += tm_ * tn * 4                      # accumulator (upper bound)
        if bias is not None:
            total += 2 * tn * 4
        return total

    while plan_bytes(tm, tk, b_resident) > _VMEM_PLAN_BUDGET and tm > 128:
        tm = _pick_tile(m_p, max(tm // 2, 128))
    if b_resident and plan_bytes(tm, tk, b_resident) > _VMEM_PLAN_BUDGET:
        b_resident = False
    while plan_bytes(tm, tk, b_resident) > _VMEM_PLAN_BUDGET and tk > 128:
        tk = _pick_tile(k_p, max(tk // 2, 128))

    grid_i, grid_j, grid_k = m_p // tm, n_p // tn, k_p // tk
    single_k = grid_k == 1
    has_bias = bias is not None

    kernel = _make_matmul_kernel(
        num_k=grid_k, tk=tk, b_resident=b_resident, has_bias=has_bias,
        single_k=single_k, compute_dtype=compute_dtype)

    in_specs = [pl.BlockSpec((tm, tk), lambda i, j, kk: (i, kk))]
    if b_resident:
        in_specs.append(pl.BlockSpec((k_p, tn), lambda i, j, kk: (0, j)))
    else:
        in_specs.append(pl.BlockSpec((tk, tn), lambda i, j, kk: (kk, j)))

    operands = [a_p, b_p]
    if has_bias:
        bias_p = _pad2d(bias.reshape(1, n), 1, n_p)
        in_specs.append(pl.BlockSpec((1, tn), lambda i, j, kk: (0, j)))
        operands.append(bias_p)

    scratch_shapes = [] if single_k else [pltpu.VMEM((tm, tn), jnp.float32)]

    cost = pl.CostEstimate(
        flops=2 * m_p * k_p * n_p,
        transcendentals=0,
        bytes_accessed=(m_p * k_p * bytes_a + k_p * n_p * bytes_b
                        + m_p * n_p * out_bytes),
    )

    out = pl.pallas_call(
        kernel,
        out_shape=jax.ShapeDtypeStruct((m_p, n_p), out_dtype),
        grid_spec=pltpu.PrefetchScalarGridSpec(
            num_scalar_prefetch=0,
            grid=(grid_i, grid_j, grid_k),
            in_specs=in_specs,
            out_specs=pl.BlockSpec((tm, tn), lambda i, j, kk: (i, j)),
            scratch_shapes=scratch_shapes,
        ),
        compiler_params=pltpu.CompilerParams(
            dimension_semantics=("parallel", "parallel", "arbitrary"),
            vmem_limit_bytes=_VMEM_LIMIT_BYTES,
        ),
        cost_estimate=cost,
    )(*operands)

    if (m_p, n_p) != (m, n):
        out = out[:m, :n]
    return out


# ---------------------------------------------------------------------------
# GCN layer
# ---------------------------------------------------------------------------
@jax.jit
def gcn_layer(x, adj, weight, bias):
    """Pallas GCN layer: adj @ (x @ weight) + bias.

    x: [N, in_f]  adj: [N, N]  weight: [in_f, out_f]  bias: [out_f]  -> [N, out_f]
    """
    n, in_f = x.shape
    out_f = weight.shape[1]
    n_p, in_p, out_p = _round_up(n, 128), _round_up(in_f, 128), _round_up(out_f, 128)

    if _fused_fits(n_p, in_p, out_p):
        # Everything fits comfortably in VMEM: one fused launch, exact f32.
        x_p = _pad2d(x, n_p, in_p)
        w_p = _pad2d(weight, in_p, out_p)
        adj_p = _pad2d(adj, n_p, n_p)
        bias_p = _pad2d(bias.reshape(1, out_f), 1, out_p)
        out = pl.pallas_call(
            _fused_gcn_kernel,
            out_shape=jax.ShapeDtypeStruct((n_p, out_p), x.dtype),
            grid_spec=pltpu.PrefetchScalarGridSpec(
                num_scalar_prefetch=0,
                grid=(1,),
                in_specs=[
                    pl.BlockSpec((n_p, in_p), lambda i: (0, 0)),
                    pl.BlockSpec((in_p, out_p), lambda i: (0, 0)),
                    pl.BlockSpec((n_p, n_p), lambda i: (0, 0)),
                    pl.BlockSpec((1, out_p), lambda i: (0, 0)),
                ],
                out_specs=pl.BlockSpec((n_p, out_p), lambda i: (0, 0)),
            ),
            compiler_params=pltpu.CompilerParams(
                dimension_semantics=("arbitrary",)),
        )(x_p, w_p, adj_p, bias_p)
        return out[:n, :out_f]

    # Large path: support produced directly in bf16 (halves its HBM traffic and
    # lets it sit VMEM-resident at half size for the dominant adj @ support call).
    support = tiled_matmul(x, weight, bias=None, out_dtype=jnp.bfloat16)
    return tiled_matmul(adj, support, bias=bias, out_dtype=x.dtype)


def xavier_uniform(key, shape, dtype=jnp.float32):
    fan_in, fan_out = shape
    bound = math.sqrt(6.0 / (fan_in + fan_out))
    return jax.random.uniform(key, shape, dtype=dtype, minval=-bound, maxval=bound)


if __name__ == "__main__":
    key = jax.random.PRNGKey(0)

    def make_inputs(k, n, in_f, out_f):
        k_x, k_adj, k_w, k_b = jax.random.split(k, 4)
        x = jax.random.normal(k_x, (n, in_f), dtype=jnp.float32)
        a = jax.random.uniform(k_adj, (n, n), dtype=jnp.float32)
        adj = (a + a.T) * 0.5
        w = xavier_uniform(k_w, (in_f, out_f))
        b = 0.1 * jax.random.normal(k_b, (out_f,), dtype=jnp.float32)
        return x, adj, w, b

    k1, k2, k3 = jax.random.split(key, 3)

    # 1) Demo shapes -> fused single-launch path (exact f32 check).
    x, adj, w, b = make_inputs(k1, 8, 32, 32)
    out = jax.block_until_ready(gcn_layer(x, adj, w, b))
    ref = adj @ (x @ w) + b
    assert out.shape == ref.shape
    assert jnp.allclose(out, ref, atol=2e-3, rtol=2e-3), "fused path mismatch"

    # 2) Tiled path: multi-K accumulator + VMEM-resident support (bf16 compute).
    x, adj, w, b = make_inputs(k2, 640, 640, 96)
    out = jax.block_until_ready(gcn_layer(x, adj, w, b))
    ref = adj @ (x @ w) + b
    rel = jnp.max(jnp.abs(out - ref)) / (jnp.max(jnp.abs(ref)) + 1e-6)
    assert out.shape == ref.shape
    assert rel < 3e-2, f"tiled (resident) path rel err {rel}"

    # 3) Tiled path: streamed B (grid_j > 1) + single-K epilogue-bias branch.
    x, adj, w, b = make_inputs(k3, 256, 640, 640)
    out = jax.block_until_ready(gcn_layer(x, adj, w, b))
    ref = adj @ (x @ w) + b
    rel = jnp.max(jnp.abs(out - ref)) / (jnp.max(jnp.abs(ref)) + 1e-6)
    assert out.shape == ref.shape
    assert rel < 3e-2, f"tiled (streamed) path rel err {rel}"

    print("KERNEL_OK")
</pallas_src>

<mosaic_0001>
module attributes {stable_mosaic.version = 11 : i64} {
  func.func @_fused_gcn_kernel(%arg0: i32, %arg1: memref<128x128xf32, #tpu.memory_space<vmem>>, %arg2: memref<128x128xf32, #tpu.memory_space<vmem>>, %arg3: memref<128x128xf32, #tpu.memory_space<vmem>>, %arg4: memref<1x128xf32, #tpu.memory_space<vmem>>, %arg5: memref<128x128xf32, #tpu.memory_space<vmem>>) attributes {dimension_semantics = [#tpu.dimension_semantics<arbitrary>], iteration_bounds = array<i64: 1>, scalar_prefetch = 0 : i64, scratch_operands = 0 : i64, tpu.core_type = #tpu.core_type<tc>, window_params = [{pipeline_mode = #tpu.pipeline_mode<synchronous>, transform_indices = @transform_0, window_bounds = array<i64: 128, 128>}, {pipeline_mode = #tpu.pipeline_mode<synchronous>, transform_indices = @transform_1, window_bounds = array<i64: 128, 128>}, {pipeline_mode = #tpu.pipeline_mode<synchronous>, transform_indices = @transform_2, window_bounds = array<i64: 128, 128>}, {pipeline_mode = #tpu.pipeline_mode<synchronous>, transform_indices = @transform_3, window_bounds = array<i64: 1, 128>}, {pipeline_mode = #tpu.pipeline_mode<synchronous>, transform_indices = @transform_4, window_bounds = array<i64: 128, 128>}]} {
    %c0 = arith.constant 0 : index
    %c0_0 = arith.constant 0 : index
    %0 = vector.load %arg1[%c0, %c0_0] : memref<128x128xf32, #tpu.memory_space<vmem>>, vector<128x128xf32>
    %c0_1 = arith.constant 0 : index
    %c0_2 = arith.constant 0 : index
    %1 = vector.load %arg2[%c0_1, %c0_2] : memref<128x128xf32, #tpu.memory_space<vmem>>, vector<128x128xf32>
    %cst = arith.constant dense<0.000000e+00> : vector<128x128xf32>
    %2 = tpu.matmul %0, %1, %cst {dimension_numbers = #tpu.dot_dimension_numbers<[1], [0], [0], [1], [0, 0, 1, 1], [], []>} : vector<128x128xf32>, vector<128x128xf32>, vector<128x128xf32> -> vector<128x128xf32>
    %c0_3 = arith.constant 0 : index
    %c0_4 = arith.constant 0 : index
    %3 = vector.load %arg3[%c0_3, %c0_4] : memref<128x128xf32, #tpu.memory_space<vmem>>, vector<128x128xf32>
    %cst_5 = arith.constant dense<0.000000e+00> : vector<128x128xf32>
    %4 = tpu.matmul %3, %2, %cst_5 {dimension_numbers = #tpu.dot_dimension_numbers<[1], [0], [0], [1], [0, 0, 1, 1], [], []>} : vector<128x128xf32>, vector<128x128xf32>, vector<128x128xf32> -> vector<128x128xf32>
    %c0_6 = arith.constant 0 : index
    %c0_7 = arith.constant 0 : index
    %5 = vector.load %arg4[%c0_6, %c0_7] : memref<1x128xf32, #tpu.memory_space<vmem>>, vector<1x128xf32>
    %6 = vector.broadcast %5 : vector<1x128xf32> to vector<128x128xf32>
    %7 = arith.addf %4, %6 : vector<128x128xf32>
    %c0_8 = arith.constant 0 : index
    %c0_9 = arith.constant 0 : index
    %8 = vector.load %arg5[%c0_8, %c0_9] : memref<128x128xf32, #tpu.memory_space<vmem>>, vector<128x128xf32>
    tpu.vector_store %arg5[%c0_8, %c0_9], %7 {strides = array<i32>} : memref<128x128xf32, #tpu.memory_space<vmem>>, vector<128x128xf32>,
    return
  }
  func.func @transform_0(%arg0: i32) -> (i32, i32) {
    %c0_i32 = arith.constant 0 : i32
    %c0_i32_0 = arith.constant 0 : i32
    %c0_i32_1 = arith.constant 0 : i32
    return %c0_i32, %c0_i32_0 : i32, i32
  }
  func.func @transform_1(%arg0: i32) -> (i32, i32) {
    %c0_i32 = arith.constant 0 : i32
    %c0_i32_0 = arith.constant 0 : i32
    %c0_i32_1 = arith.constant 0 : i32
    return %c0_i32, %c0_i32_0 : i32, i32
  }
  func.func @transform_2(%arg0: i32) -> (i32, i32) {
    %c0_i32 = arith.constant 0 : i32
    %c0_i32_0 = arith.constant 0 : i32
    %c0_i32_1 = arith.constant 0 : i32
    return %c0_i32, %c0_i32_0 : i32, i32
  }
  func.func @transform_3(%arg0: i32) -> (i32, i32) {
    %c0_i32 = arith.constant 0 : i32
    %c0_i32_0 = arith.constant 0 : i32
    %c0_i32_1 = arith.constant 0 : i32
    return %c0_i32, %c0_i32_0 : i32, i32
  }
  func.func @transform_4(%arg0: i32) -> (i32, i32) {
    %c0_i32 = arith.constant 0 : i32
    %c0_i32_0 = arith.constant 0 : i32
    %c0_i32_1 = arith.constant 0 : i32
    return %c0_i32, %c0_i32_0 : i32, i32
  }
}

</mosaic_0001>

<llo_original>
// kernel: gcn_layer.1
$region0: #{gcn_layer.1}
  #allocation0 [shape = 'u32[]', space=smem, size = 0x4, offset = 0x4, fixed_abs, tag = 'smem constant byte address 0x4 - core index']
  #allocation1 [shape = 'u32[72,128]{1,0:T(1,128)}', space=vmem, size = 0x9000, scoped, tag = 'internal scratch']
  %s0 = inlined_call_operand.vmem [shape: f32[128,128], index: 0, kind: input, shape index: {}]
  %s1 = inlined_call_operand.vmem [shape: f32[128,128], index: 1, kind: input, shape index: {}]
  %s2 = inlined_call_operand.vmem [shape: f32[128,128], index: 2, kind: input, shape index: {}]
  %s3 = inlined_call_operand.vmem [shape: f32[1,128], index: 3, kind: input, shape index: {}]
  %s4 = inlined_call_operand.vmem [shape: f32[128,128], index: 4, kind: output, shape index: {}]
  %s5 = sld [smem:[#allocation0]]
  $region26: #{gcn_layer.1} parent=0
    _
  %s7 = ssub.s32 1, %s5
  %s8 = scalar_select 0, %s7, %s5
  // Predicated region
  $region2: #{gcn_layer.1} parent=0 // pred_check
    _
  $region3: #{gcn_layer.1} parent=0 // pred_check_branch
    %10 = sbr.rel (0) target = $region5
  $region4: #{gcn_layer.1} parent=0 // pred_region
    _
  $region5: #{gcn_layer.1} parent=0 // pred_fallthru
    _
  // Predicated region
  $region6: #{gcn_layer.1} parent=0 // pred_check
    _
  $region7: #{gcn_layer.1} parent=0 // pred_check_branch
    %12 = sbr.rel (0) target = $region9
  $region8: #{gcn_layer.1} parent=0 // pred_region
    _
  $region9: #{gcn_layer.1} parent=0 // pred_fallthru
    _
  // Predicated region
  $region10: #{gcn_layer.1} parent=0 // pred_check
    _
  $region11: #{gcn_layer.1} parent=0 // pred_check_branch
    %14 = sbr.rel (0) target = $region13
  $region12: #{gcn_layer.1} parent=0 // pred_region
    _
  $region13: #{gcn_layer.1} parent=0 // pred_fallthru
    _
  // Predicated region
  $region14: #{gcn_layer.1} parent=0 // pred_check
    _
  $region15: #{gcn_layer.1} parent=0 // pred_check_branch
    %16 = sbr.rel (0) target = $region17
  $region16: #{gcn_layer.1} parent=0 // pred_region
    _
  $region17: #{gcn_layer.1} parent=0 // pred_fallthru
    _
  %v17 = vld [vmem:[%s0] sm:$0xff]
  %v18 = vld [vmem:[%s0 + $0x8] sm:$0xff]
  %v19 = vld [vmem:[%s0 + $0x10] sm:$0xff]
  %v20 = vld [vmem:[%s0 + $0x18] sm:$0xff]
  %v21 = vld [vmem:[%s0 + $0x20] sm:$0xff]
  %v22 = vld [vmem:[%s0 + $0x28] sm:$0xff]
  %v23 = vld [vmem:[%s0 + $0x30] sm:$0xff]
  %v24 = vld [vmem:[%s0 + $0x38] sm:$0xff]
  %v25 = vld [vmem:[%s0 + $0x40] sm:$0xff]
  %v26 = vld [vmem:[%s0 + $0x48] sm:$0xff]
  %v27 = vld [vmem:[%s0 + $0x50] sm:$0xff]
  %v28 = vld [vmem:[%s0 + $0x58] sm:$0xff]
  %v29 = vld [vmem:[%s0 + $0x60] sm:$0xff]
  %v30 = vld [vmem:[%s0 + $0x68] sm:$0xff]
  %v31 = vld [vmem:[%s0 + $0x70] sm:$0xff]
  %v32 = vld [vmem:[%s0 + $0x78] sm:$0xff]
  %v33 = vld [vmem:[%s1] sm:$0xff]
  %v34 = vld [vmem:[%s1 + $0x8] sm:$0xff]
  %v35 = vld [vmem:[%s1 + $0x10] sm:$0xff]
  %v36 = vld [vmem:[%s1 + $0x18] sm:$0xff]
  %v37 = vld [vmem:[%s1 + $0x20] sm:$0xff]
  %v38 = vld [vmem:[%s1 + $0x28] sm:$0xff]
  %v39 = vld [vmem:[%s1 + $0x30] sm:$0xff]
  %v40 = vld [vmem:[%s1 + $0x38] sm:$0xff]
  %v41 = vld [vmem:[%s1 + $0x40] sm:$0xff]
  %v42 = vld [vmem:[%s1 + $0x48] sm:$0xff]
  %v43 = vld [vmem:[%s1 + $0x50] sm:$0xff]
  %v44 = vld [vmem:[%s1 + $0x58] sm:$0xff]
  %v45 = vld [vmem:[%s1 + $0x60] sm:$0xff]
  %v46 = vld [vmem:[%s1 + $0x68] sm:$0xff]
  %v47 = vld [vmem:[%s1 + $0x70] sm:$0xff]
  %v48 = vld [vmem:[%s1 + $0x78] sm:$0xff]
  %49 = vmatpush.msra.mxu0 %v48
  %50 = vmatpush.msra.mxu0 %v47
  %51 = vmatpush.msra.mxu0 %v46
  %52 = vmatpush.msra.mxu0 %v45
  %53 = vmatpush.msra.mxu0 %v44
  %54 = vmatpush.msra.mxu0 %v43
  %55 = vmatpush.msra.mxu0 %v42
  %56 = vmatpush.msra.mxu0 %v41
  %57 = vmatpush.msra.mxu0 %v40
  %58 = vmatpush.msra.mxu0 %v39
  %59 = vmatpush.msra.mxu0 %v38
  %60 = vmatpush.msra.mxu0 %v37
  %61 = vmatpush.msra.mxu0 %v36
  %62 = vmatpush.msra.mxu0 %v35
  %63 = vmatpush.msra.mxu0 %v34
  %64 = vmatpush.msra.mxu0 %v33
  %65 = vmatmul.f32.gmra.mxu0 %v17
  %v66 = vpop.f32.mrf.mxu0
  %v67 = vadd.f32 0.0, %v66
  %68 = vmatmul.f32.gmra.mxu0 %v18
  %v69 = vpop.f32.mrf.mxu0
  %v70 = vadd.f32 0.0, %v69
  %71 = vmatmul.f32.gmra.mxu0 %v19
  %v72 = vpop.f32.mrf.mxu0
  %v73 = vadd.f32 0.0, %v72
  %74 = vmatmul.f32.gmra.mxu0 %v20
  %v75 = vpop.f32.mrf.mxu0
  %v76 = vadd.f32 0.0, %v75
  %77 = vmatmul.f32.gmra.mxu0 %v21
  %v78 = vpop.f32.mrf.mxu0
  %v79 = vadd.f32 0.0, %v78
  %80 = vmatmul.f32.gmra.mxu0 %v22
  %v81 = vpop.f32.mrf.mxu0
  %v82 = vadd.f32 0.0, %v81
  %83 = vmatmul.f32.gmra.mxu0 %v23
  %v84 = vpop.f32.mrf.mxu0
  %v85 = vadd.f32 0.0, %v84
  %86 = vmatmul.f32.gmra.mxu0 %v24
  %v87 = vpop.f32.mrf.mxu0
  %v88 = vadd.f32 0.0, %v87
  %89 = vmatmul.f32.gmra.mxu0 %v25
  %v90 = vpop.f32.mrf.mxu0
  %v91 = vadd.f32 0.0, %v90
  %92 = vmatmul.f32.gmra.mxu0 %v26
  %v93 = vpop.f32.mrf.mxu0
  %v94 = vadd.f32 0.0, %v93
  %95 = vmatmul.f32.gmra.mxu0 %v27
  %v96 = vpop.f32.mrf.mxu0
  %v97 = vadd.f32 0.0, %v96
  %98 = vmatmul.f32.gmra.mxu0 %v28
  %v99 = vpop.f32.mrf.mxu0
  %v100 = vadd.f32 0.0, %v99
  %101 = vmatmul.f32.gmra.mxu0 %v29
  %v102 = vpop.f32.mrf.mxu0
  %v103 = vadd.f32 0.0, %v102
  %104 = vmatmul.f32.gmra.mxu0 %v30
  %v105 = vpop.f32.mrf.mxu0
  %v106 = vadd.f32 0.0, %v105
  %107 = vmatmul.f32.gmra.mxu0 %v31
  %v108 = vpop.f32.mrf.mxu0
  %v109 = vadd.f32 0.0, %v108
  %110 = vmatmul.f32.gmra.mxu0 %v32
  %v111 = vpop.f32.mrf.mxu0
  %v112 = vadd.f32 0.0, %v111
  %113 = vdwg.mxu0
  %v114 = vld [vmem:[%s2] sm:$0xff]
  %v115 = vld [vmem:[%s2 + $0x8] sm:$0xff]
  %v116 = vld [vmem:[%s2 + $0x10] sm:$0xff]
  %v117 = vld [vmem:[%s2 + $0x18] sm:$0xff]
  %v118 = vld [vmem:[%s2 + $0x20] sm:$0xff]
  %v119 = vld [vmem:[%s2 + $0x28] sm:$0xff]
  %v120 = vld [vmem:[%s2 + $0x30] sm:$0xff]
  %v121 = vld [vmem:[%s2 + $0x38] sm:$0xff]
  %v122 = vld [vmem:[%s2 + $0x40] sm:$0xff]
  %v123 = vld [vmem:[%s2 + $0x48] sm:$0xff]
  %v124 = vld [vmem:[%s2 + $0x50] sm:$0xff]
  %v125 = vld [vmem:[%s2 + $0x58] sm:$0xff]
  %v126 = vld [vmem:[%s2 + $0x60] sm:$0xff]
  %v127 = vld [vmem:[%s2 + $0x68] sm:$0xff]
  %v128 = vld [vmem:[%s2 + $0x70] sm:$0xff]
  %v129 = vld [vmem:[%s2 + $0x78] sm:$0xff]
  %v130 = vld [vmem:[%s3] sm:$0x1]
  %v132 = vperm.slane %v130, 0
  %134 = vmatpush.msra.mxu0 %v112
  %135 = vmatpush.msra.mxu0 %v109
  %136 = vmatpush.msra.mxu0 %v106
  %137 = vmatpush.msra.mxu0 %v103
  %138 = vmatpush.msra.mxu0 %v100
  %139 = vmatpush.msra.mxu0 %v97
  %140 = vmatpush.msra.mxu0 %v94
  %141 = vmatpush.msra.mxu0 %v91
  %142 = vmatpush.msra.mxu0 %v88
  %143 = vmatpush.msra.mxu0 %v85
  %144 = vmatpush.msra.mxu0 %v82
  %145 = vmatpush.msra.mxu0 %v79
  %146 = vmatpush.msra.mxu0 %v76
  %147 = vmatpush.msra.mxu0 %v73
  %148 = vmatpush.msra.mxu0 %v70
  %149 = vmatpush.msra.mxu0 %v67
  %150 = vmatmul.f32.gmra.mxu0 %v114
  %v151 = vpop.f32.mrf.mxu0
  %v152 = vadd.f32 %v132, %v151
  %153 = vmatmul.f32.gmra.mxu0 %v115
  %v154 = vpop.f32.mrf.mxu0
  %v155 = vadd.f32 %v132, %v154
  %156 = vmatmul.f32.gmra.mxu0 %v116
  %v157 = vpop.f32.mrf.mxu0
  %v158 = vadd.f32 %v132, %v157
  %159 = vmatmul.f32.gmra.mxu0 %v117
  %v160 = vpop.f32.mrf.mxu0
  %v161 = vadd.f32 %v132, %v160
  %162 = vmatmul.f32.gmra.mxu0 %v118
  %v163 = vpop.f32.mrf.mxu0
  %v164 = vadd.f32 %v132, %v163
  %165 = vmatmul.f32.gmra.mxu0 %v119
  %v166 = vpop.f32.mrf.mxu0
  %v167 = vadd.f32 %v132, %v166
  %168 = vmatmul.f32.gmra.mxu0 %v120
  %v169 = vpop.f32.mrf.mxu0
  %v170 = vadd.f32 %v132, %v169
  %171 = vmatmul.f32.gmra.mxu0 %v121
  %v172 = vpop.f32.mrf.mxu0
  %v173 = vadd.f32 %v132, %v172
  %174 = vmatmul.f32.gmra.mxu0 %v122
  %v175 = vpop.f32.mrf.mxu0
  %v176 = vadd.f32 %v132, %v175
  %177 = vmatmul.f32.gmra.mxu0 %v123
  %v178 = vpop.f32.mrf.mxu0
  %v179 = vadd.f32 %v132, %v178
  %180 = vmatmul.f32.gmra.mxu0 %v124
  %v181 = vpop.f32.mrf.mxu0
  %v182 = vadd.f32 %v132, %v181
  %183 = vmatmul.f32.gmra.mxu0 %v125
  %v184 = vpop.f32.mrf.mxu0
  %v185 = vadd.f32 %v132, %v184
  %186 = vmatmul.f32.gmra.mxu0 %v126
  %v187 = vpop.f32.mrf.mxu0
  %v188 = vadd.f32 %v132, %v187
  %189 = vmatmul.f32.gmra.mxu0 %v127
  %v190 = vpop.f32.mrf.mxu0
  %v191 = vadd.f32 %v132, %v190
  %192 = vmatmul.f32.gmra.mxu0 %v128
  %v193 = vpop.f32.mrf.mxu0
  %v194 = vadd.f32 %v132, %v193
  %195 = vmatmul.f32.gmra.mxu0 %v129
  %v196 = vpop.f32.mrf.mxu0
  %v197 = vadd.f32 %v132, %v196
  %198 = vdwg.mxu0
  %199 = vst [vmem:[%s4] sm:$0xff] %v152
  %200 = vst [vmem:[%s4 + $0x8] sm:$0xff] %v155
  %201 = vst [vmem:[%s4 + $0x10] sm:$0xff] %v158
  %202 = vst [vmem:[%s4 + $0x18] sm:$0xff] %v161
  %203 = vst [vmem:[%s4 + $0x20] sm:$0xff] %v164
  %204 = vst [vmem:[%s4 + $0x28] sm:$0xff] %v167
  %205 = vst [vmem:[%s4 + $0x30] sm:$0xff] %v170
  %206 = vst [vmem:[%s4 + $0x38] sm:$0xff] %v173
  %207 = vst [vmem:[%s4 + $0x40] sm:$0xff] %v176
  %208 = vst [vmem:[%s4 + $0x48] sm:$0xff] %v179
  %209 = vst [vmem:[%s4 + $0x50] sm:$0xff] %v182
  %210 = vst [vmem:[%s4 + $0x58] sm:$0xff] %v185
  %211 = vst [vmem:[%s4 + $0x60] sm:$0xff] %v188
  %212 = vst [vmem:[%s4 + $0x68] sm:$0xff] %v191
  %213 = vst [vmem:[%s4 + $0x70] sm:$0xff] %v194
  %214 = vst [vmem:[%s4 + $0x78] sm:$0xff] %v197
  // Predicated region
  $region18: #{gcn_layer.1} parent=0 // pred_check
    _
  $region19: #{gcn_layer.1} parent=0 // pred_check_branch
    %216 = sbr.rel (0) target = $region21
  $region20: #{gcn_layer.1} parent=0 // pred_region
    _
  $region21: #{gcn_layer.1} parent=0 // pred_fallthru
    _
  // Predicated region
  $region22: #{gcn_layer.1} parent=0 // pred_check
    _
  $region23: #{gcn_layer.1} parent=0 // pred_check_branch
    %218 = sbr.rel (0) target = $region25
  $region24: #{gcn_layer.1} parent=0 // pred_region
    _
  $region25: #{gcn_layer.1} parent=0 // pred_fallthru
    _

</llo_original>
